<compile_context>
chip_gen: v7x
topology: tpu7x:2x2x1
jax: 0.10.0
libtpu: 0.0.40
codegen_flags: <defaults>
</compile_context>

<pallas_src>
import jax
import jax.numpy as jnp
from jax.experimental import pallas as pl
from jax.experimental.pallas import tpu as pltpu

HIDDEN = 50
HPAD = 128      # hidden padded to one full sublane/lane tile
LANES = 128

# Column layout of the per-hidden-unit vector slab ([HPAD, 8] f32).
_COL_W1_0 = 0   # w1[0, :]  (weights for input feature 0)
_COL_W1_1 = 1   # w1[1, :]  (weights for input feature 1)
_COL_B1 = 2     # b1
_COL_B2 = 3     # b2
_COL_W3 = 4     # w3[:, 0]
_COL_B3 = 5     # b3 scalar replicated down the column
_VEC_COLS = 8


def gabor_mlp_kernel(xt_ref, w2t_ref, vec_ref, o_ref):
    # Batch-on-lanes orientation: hidden on sublanes, batch rows on lanes.
    x0 = xt_ref[0:1, :]                              # [1, TB]
    x1 = xt_ref[1:2, :]                              # [1, TB]

    w1c0 = vec_ref[:, _COL_W1_0:_COL_W1_0 + 1]       # [HPAD, 1]
    w1c1 = vec_ref[:, _COL_W1_1:_COL_W1_1 + 1]       # [HPAD, 1]
    b1c = vec_ref[:, _COL_B1:_COL_B1 + 1]            # [HPAD, 1]
    b2c = vec_ref[:, _COL_B2:_COL_B2 + 1]            # [HPAD, 1]
    w3c = vec_ref[:, _COL_W3:_COL_W3 + 1]            # [HPAD, 1]
    b3 = vec_ref[0:1, _COL_B3:_COL_B3 + 1]           # [1, 1]

    # Layer 1 on the VPU: K=2 -> two broadcast MACs, no degenerate MXU pass.
    h1 = jnp.maximum(w1c0 * x0 + w1c1 * x1 + b1c, 0.0)           # [HPAD, TB]

    # Layer 2 on the MXU: the only real GEMM. Padded rows/cols are zero.
    h2 = jnp.dot(w2t_ref[...], h1, preferred_element_type=jnp.float32)
    h2 = jnp.maximum(h2 + b2c, 0.0)                               # [HPAD, TB]

    # Layer 3: scale by w3 (VPU) and reduce over the hidden sublanes (XLU).
    # Result is a lane-packed [1, TB] row: one batch element per lane.
    out_row = jnp.sum(h2 * w3c, axis=0, keepdims=True) + b3       # [1, TB]

    o_ref[...] = out_row.astype(o_ref.dtype)


def _pack_params(params):
    """Pack params for the batch-on-lanes kernel: w2^T (padded) + vector slab."""
    w1, b1 = params["w1"], params["b1"]      # [2, 50], [1, 50]
    w2, b2 = params["w2"], params["b2"]      # [50, 50], [1, 50]
    w3, b3 = params["w3"], params["b3"]      # [50, 1], [1, 1]

    w2t = jnp.zeros((HPAD, HPAD), jnp.float32)
    w2t = w2t.at[:HIDDEN, :HIDDEN].set(w2.astype(jnp.float32).T)

    vec = jnp.zeros((HPAD, _VEC_COLS), jnp.float32)
    vec = vec.at[:HIDDEN, _COL_W1_0].set(w1[0, :].astype(jnp.float32))
    vec = vec.at[:HIDDEN, _COL_W1_1].set(w1[1, :].astype(jnp.float32))
    vec = vec.at[:HIDDEN, _COL_B1].set(b1[0, :].astype(jnp.float32))
    vec = vec.at[:HIDDEN, _COL_B2].set(b2[0, :].astype(jnp.float32))
    vec = vec.at[:HIDDEN, _COL_W3].set(w3[:, 0].astype(jnp.float32))
    vec = vec.at[:, _COL_B3].set(b3[0, 0].astype(jnp.float32))
    return w2t, vec


def gabor_model_forward(x, params, *, block_b=2048):
    """x: [B, 2] float32. Returns [B, 1] float32 (matches nn.Sequential phi)."""
    B = x.shape[0]
    # Batch block must be a multiple of 128 lanes; don't exceed what B needs.
    b_min = ((B + LANES - 1) // LANES) * LANES
    block_b = max(LANES, min((block_b // LANES) * LANES, b_min))
    num_blocks = pl.cdiv(B, block_b)
    b_pad = num_blocks * block_b

    # Lane-dense input: [2, B_pad] -> each block DMA is 2 contiguous runs.
    xt = x.astype(jnp.float32).T
    xt = jnp.pad(xt, ((0, 0), (0, b_pad - B)))
    w2t, vec = _pack_params(params)

    out = pl.pallas_call(
        gabor_mlp_kernel,
        out_shape=jax.ShapeDtypeStruct((1, b_pad), jnp.float32),
        grid=(num_blocks,),
        in_specs=[
            # x block: sublane dim (2) equals the full array dim, lanes /128.
            pl.BlockSpec((2, block_b), lambda i: (0, i)),
            # Parameters stay resident (constant block index every step).
            pl.BlockSpec((HPAD, HPAD), lambda i: (0, 0)),
            pl.BlockSpec((HPAD, _VEC_COLS), lambda i: (0, 0)),
        ],
        # Lane-packed output: each grid step writes a disjoint 128-aligned
        # lane range of the single output row (4 B of HBM per batch row).
        out_specs=pl.BlockSpec((1, block_b), lambda i: (0, i)),
        compiler_params=pltpu.CompilerParams(
            dimension_semantics=("parallel",),   # megacore sharding on v7x
        ),
    )(xt, w2t, vec)

    return out.reshape(-1)[:B].reshape(B, 1)


def init_params(key):
    """Deterministic init matching nn.Linear shapes (weights as [in, out])."""
    k1, k2, k3, k4, k5, k6 = jax.random.split(key, 6)

    def linear_init(kw, kb, fan_in, fan_out):
        # Mimic PyTorch's default uniform(-1/sqrt(fan_in), 1/sqrt(fan_in)).
        bound = 1.0 / jnp.sqrt(jnp.float32(fan_in))
        w = jax.random.uniform(kw, (fan_in, fan_out), jnp.float32, -bound, bound)
        b = jax.random.uniform(kb, (1, fan_out), jnp.float32, -bound, bound)
        return w, b

    w1, b1 = linear_init(k1, k2, 2, HIDDEN)
    w2, b2 = linear_init(k3, k4, HIDDEN, HIDDEN)
    w3, b3 = linear_init(k5, k6, HIDDEN, 1)
    return {"w1": w1, "b1": b1, "w2": w2, "b2": b2, "w3": w3, "b3": b3}


def reference_forward(x, p):
    h1 = jnp.maximum(x @ p["w1"] + p["b1"], 0.0)
    h2 = jnp.maximum(h1 @ p["w2"] + p["b2"], 0.0)
    return h2 @ p["w3"] + p["b3"]


if __name__ == "__main__":
    key = jax.random.PRNGKey(0)
    kx, kp = jax.random.split(key)

    N = 28  # matches the module's data-generation constant
    # Inputs are 2-D coordinates in [-15, 15], consistent with `bounds`.
    x = jax.random.uniform(kx, (N, 2), jnp.float32, -15.0, 15.0)

    params = init_params(kp)

    out = gabor_model_forward(x, params)
    out = jax.block_until_ready(out)

    ref = reference_forward(x, params)
    assert out.shape == (N, 1)
    assert jnp.allclose(out, ref, atol=1e-3, rtol=1e-3), (
        f"max abs diff = {jnp.max(jnp.abs(out - ref))}")

    print("KERNEL_OK")
</pallas_src>

<mosaic_0001>
module attributes {stable_mosaic.version = 11 : i64} {
  func.func @gabor_mlp_kernel(%arg0: i32, %arg1: memref<2x128xf32, #tpu.memory_space<vmem>>, %arg2: memref<128x128xf32, #tpu.memory_space<vmem>>, %arg3: memref<128x8xf32, #tpu.memory_space<vmem>>, %arg4: memref<1x128xf32, #tpu.memory_space<vmem>>) attributes {dimension_semantics = [#tpu.dimension_semantics<parallel>], iteration_bounds = array<i64: 1>, scalar_prefetch = 0 : i64, scratch_operands = 0 : i64, tpu.core_type = #tpu.core_type<tc>, window_params = [{transform_indices = @transform_0, window_bounds = array<i64: 2, 128>}, {pipeline_mode = #tpu.pipeline_mode<synchronous>, transform_indices = @transform_1, window_bounds = array<i64: 128, 128>}, {pipeline_mode = #tpu.pipeline_mode<synchronous>, transform_indices = @transform_2, window_bounds = array<i64: 128, 8>}, {transform_indices = @transform_3, window_bounds = array<i64: 1, 128>}]} {
    %c0 = arith.constant 0 : index
    %c0_0 = arith.constant 0 : index
    %0 = vector.load %arg1[%c0, %c0_0] : memref<2x128xf32, #tpu.memory_space<vmem>>, vector<1x128xf32>
    %c1 = arith.constant 1 : index
    %c0_1 = arith.constant 0 : index
    %1 = vector.load %arg1[%c1, %c0_1] : memref<2x128xf32, #tpu.memory_space<vmem>>, vector<1x128xf32>
    %c0_2 = arith.constant 0 : index
    %c0_3 = arith.constant 0 : index
    %2 = vector.load %arg3[%c0_2, %c0_3] : memref<128x8xf32, #tpu.memory_space<vmem>>, vector<128x1xf32>
    %c0_4 = arith.constant 0 : index
    %c1_5 = arith.constant 1 : index
    %3 = vector.load %arg3[%c0_4, %c1_5] : memref<128x8xf32, #tpu.memory_space<vmem>>, vector<128x1xf32>
    %c0_6 = arith.constant 0 : index
    %c2 = arith.constant 2 : index
    %4 = vector.load %arg3[%c0_6, %c2] : memref<128x8xf32, #tpu.memory_space<vmem>>, vector<128x1xf32>
    %c0_7 = arith.constant 0 : index
    %c3 = arith.constant 3 : index
    %5 = vector.load %arg3[%c0_7, %c3] : memref<128x8xf32, #tpu.memory_space<vmem>>, vector<128x1xf32>
    %c0_8 = arith.constant 0 : index
    %c4 = arith.constant 4 : index
    %6 = vector.load %arg3[%c0_8, %c4] : memref<128x8xf32, #tpu.memory_space<vmem>>, vector<128x1xf32>
    %c0_9 = arith.constant 0 : index
    %c5 = arith.constant 5 : index
    %7 = vector.load %arg3[%c0_9, %c5] : memref<128x8xf32, #tpu.memory_space<vmem>>, vector<1x1xf32>
    %8 = vector.broadcast %2 : vector<128x1xf32> to vector<128x128xf32>
    %9 = vector.broadcast %0 : vector<1x128xf32> to vector<128x128xf32>
    %10 = arith.mulf %8, %9 : vector<128x128xf32>
    %11 = vector.broadcast %3 : vector<128x1xf32> to vector<128x128xf32>
    %12 = vector.broadcast %1 : vector<1x128xf32> to vector<128x128xf32>
    %13 = arith.mulf %11, %12 : vector<128x128xf32>
    %14 = arith.addf %10, %13 : vector<128x128xf32>
    %15 = vector.broadcast %4 : vector<128x1xf32> to vector<128x128xf32>
    %16 = arith.addf %14, %15 : vector<128x128xf32>
    %cst = arith.constant 0.000000e+00 : f32
    %17 = vector.broadcast %cst : f32 to vector<128x128xf32>
    %18 = arith.maximumf %16, %17 : vector<128x128xf32>
    %c0_10 = arith.constant 0 : index
    %c0_11 = arith.constant 0 : index
    %19 = vector.load %arg2[%c0_10, %c0_11] : memref<128x128xf32, #tpu.memory_space<vmem>>, vector<128x128xf32>
    %cst_12 = arith.constant dense<0.000000e+00> : vector<128x128xf32>
    %20 = tpu.matmul %19, %18, %cst_12 {dimension_numbers = #tpu.dot_dimension_numbers<[1], [0], [0], [1], [0, 0, 1, 1], [], []>} : vector<128x128xf32>, vector<128x128xf32>, vector<128x128xf32> -> vector<128x128xf32>
    %21 = vector.broadcast %5 : vector<128x1xf32> to vector<128x128xf32>
    %22 = arith.addf %20, %21 : vector<128x128xf32>
    %cst_13 = arith.constant 0.000000e+00 : f32
    %23 = vector.broadcast %cst_13 : f32 to vector<128x128xf32>
    %24 = arith.maximumf %22, %23 : vector<128x128xf32>
    %25 = vector.broadcast %6 : vector<128x1xf32> to vector<128x128xf32>
    %26 = arith.mulf %24, %25 : vector<128x128xf32>
    %cst_14 = arith.constant dense<0.000000e+00> : vector<128xf32>
    %27 = vector.multi_reduction <add>, %26, %cst_14 [0] : vector<128x128xf32> to vector<128xf32>
    %28 = vector.shape_cast %27 : vector<128xf32> to vector<1x128xf32>
    %29 = vector.broadcast %7 : vector<1x1xf32> to vector<1x128xf32>
    %30 = arith.addf %28, %29 : vector<1x128xf32>
    %c0_15 = arith.constant 0 : index
    %c0_16 = arith.constant 0 : index
    %31 = vector.load %arg4[%c0_15, %c0_16] : memref<1x128xf32, #tpu.memory_space<vmem>>, vector<1x128xf32>
    tpu.vector_store %arg4[%c0_15, %c0_16], %30 {strides = array<i32>} : memref<1x128xf32, #tpu.memory_space<vmem>>, vector<1x128xf32>,
    return
  }
  func.func @transform_0(%arg0: i32) -> (i32, i32) {
    %c0_i32 = arith.constant 0 : i32
    %c0_i32_0 = arith.constant 0 : i32
    return %c0_i32, %arg0 : i32, i32
  }
  func.func @transform_1(%arg0: i32) -> (i32, i32) {
    %c0_i32 = arith.constant 0 : i32
    %c0_i32_0 = arith.constant 0 : i32
    %c0_i32_1 = arith.constant 0 : i32
    return %c0_i32, %c0_i32_0 : i32, i32
  }
  func.func @transform_2(%arg0: i32) -> (i32, i32) {
    %c0_i32 = arith.constant 0 : i32
    %c0_i32_0 = arith.constant 0 : i32
    %c0_i32_1 = arith.constant 0 : i32
    return %c0_i32, %c0_i32_0 : i32, i32
  }
  func.func @transform_3(%arg0: i32) -> (i32, i32) {
    %c0_i32 = arith.constant 0 : i32
    %c0_i32_0 = arith.constant 0 : i32
    return %c0_i32, %arg0 : i32, i32
  }
}

</mosaic_0001>

<llo_original>
// kernel: tpu_custom_call.1
$region0: #{tpu_custom_call.1}
  #allocation0 [shape = 'u32[]', space=smem, size = 0x4, offset = 0x4, fixed_abs, tag = 'smem constant byte address 0x4 - core index']
  #allocation1 [shape = 'u32[144,128]{1,0:T(1,128)}', space=vmem, size = 0x12000, scoped, tag = 'internal scratch']
  %s0 = inlined_call_operand.vmem [shape: f32[2,128], index: 0, kind: input, shape index: {}]
  %s1 = inlined_call_operand.vmem [shape: f32[128,128], index: 1, kind: input, shape index: {}]
  %s2 = inlined_call_operand.vmem [shape: f32[128,8], index: 2, kind: input, shape index: {}]
  %s3 = inlined_call_operand.hbm [shape: f32[1,128], index: 3, kind: output, shape index: {}]
  %s4 = sld [smem:[#allocation0]]
  $region22: #{tpu_custom_call.1} parent=0
    _
  %s6 = ssub.s32 1, %s4
  %s7 = scalar_select 0, %s6, %s4
  $region1: #{tpu_custom_call.1} parent=0
    #allocation2 [shape = 'u8[512]{0}', space=vmem, size = 0x400, scoped, tag = 'output window, operand 0, single buffered']
    #allocation3 [shape = 's32[1]{0}', space=sflag, size = 0x4, scoped, tag = 'scoped memory for tpu_custom_call.1']
    %8 = vsyncpa [#allocation3], 0
    // Predicated region
    $region2: #{tpu_custom_call.1} parent=1 // pred_check
      _
    $region3: #{tpu_custom_call.1} parent=1 // pred_check_branch
      %10 = sbr.rel (0) target = $region5
    $region4: #{tpu_custom_call.1} parent=1 // pred_region
      _
    $region5: #{tpu_custom_call.1} parent=1 // pred_fallthru
      _
    // Predicated region
    $region6: #{tpu_custom_call.1} parent=1 // pred_check
      _
    $region7: #{tpu_custom_call.1} parent=1 // pred_check_branch
      %12 = sbr.rel (0) target = $region9
    $region8: #{tpu_custom_call.1} parent=1 // pred_region
      _
    $region9: #{tpu_custom_call.1} parent=1 // pred_fallthru
      _
    // Predicated region
    $region10: #{tpu_custom_call.1} parent=1 // pred_check
      _
    $region11: #{tpu_custom_call.1} parent=1 // pred_check_branch
      %14 = sbr.rel (0) target = $region13
    $region12: #{tpu_custom_call.1} parent=1 // pred_region
      _
    $region13: #{tpu_custom_call.1} parent=1 // pred_fallthru
      _
    %v15 = vld [vmem:[%s0] sm:$0x1]
    %v16 = vld [vmem:[%s0 + $0x1] sm:$0x1]
    %v17 = vld [vmem:[%s2] sm:$0xff]
    %v18 = vld [vmem:[%s2 + $0x8] sm:$0xff]
    %v19 = vld [vmem:[%s2 + $0x10] sm:$0xff]
    %v20 = vld [vmem:[%s2 + $0x18] sm:$0xff]
    %v21 = vld [vmem:[%s2 + $0x20] sm:$0xff]
    %v22 = vld [vmem:[%s2 + $0x28] sm:$0xff]
    %v23 = vld [vmem:[%s2 + $0x30] sm:$0xff]
    %v24 = vld [vmem:[%s2 + $0x38] sm:$0xff]
    %v25 = vld [vmem:[%s2 + $0x40] sm:$0xff]
    %v26 = vld [vmem:[%s2 + $0x48] sm:$0xff]
    %v27 = vld [vmem:[%s2 + $0x50] sm:$0xff]
    %v28 = vld [vmem:[%s2 + $0x58] sm:$0xff]
    %v29 = vld [vmem:[%s2 + $0x60] sm:$0xff]
    %v30 = vld [vmem:[%s2 + $0x68] sm:$0xff]
    %v31 = vld [vmem:[%s2 + $0x70] sm:$0xff]
    %v32 = vld [vmem:[%s2 + $0x78] sm:$0xff]
    %v33 = vld [vmem:[%s2] sm:$0x1]
    %35 = vset.pattern.permute.xlu0 0
    %36 = vperm.xlu0 %35, %v17
    %v37 = vpop.permute.xlu0 %36
    %40 = vset.pattern.permute.xlu0 0
    %41 = vperm.xlu0 %40, %v18
    %v42 = vpop.permute.xlu0 %41
    %45 = vset.pattern.permute.xlu0 0
    %46 = vperm.xlu0 %45, %v19
    %v47 = vpop.permute.xlu0 %46
    %50 = vset.pattern.permute.xlu0 0
    %51 = vperm.xlu0 %50, %v20
    %v52 = vpop.permute.xlu0 %51
    %55 = vset.pattern.permute.xlu0 0
    %56 = vperm.xlu0 %55, %v21
    %v57 = vpop.permute.xlu0 %56
    %60 = vset.pattern.permute.xlu0 0
    %61 = vperm.xlu0 %60, %v22
    %v62 = vpop.permute.xlu0 %61
    %65 = vset.pattern.permute.xlu0 0
    %66 = vperm.xlu0 %65, %v23
    %v67 = vpop.permute.xlu0 %66
    %70 = vset.pattern.permute.xlu0 0
    %71 = vperm.xlu0 %70, %v24
    %v72 = vpop.permute.xlu0 %71
    %75 = vset.pattern.permute.xlu0 0
    %76 = vperm.xlu0 %75, %v25
    %v77 = vpop.permute.xlu0 %76
    %80 = vset.pattern.permute.xlu0 0
    %81 = vperm.xlu0 %80, %v26
    %v82 = vpop.permute.xlu0 %81
    %85 = vset.pattern.permute.xlu0 0
    %86 = vperm.xlu0 %85, %v27
    %v87 = vpop.permute.xlu0 %86
    %90 = vset.pattern.permute.xlu0 0
    %91 = vperm.xlu0 %90, %v28
    %v92 = vpop.permute.xlu0 %91
    %95 = vset.pattern.permute.xlu0 0
    %96 = vperm.xlu0 %95, %v29
    %v97 = vpop.permute.xlu0 %96
    %100 = vset.pattern.permute.xlu0 0
    %101 = vperm.xlu0 %100, %v30
    %v102 = vpop.permute.xlu0 %101
    %105 = vset.pattern.permute.xlu0 0
    %106 = vperm.xlu0 %105, %v31
    %v107 = vpop.permute.xlu0 %106
    %110 = vset.pattern.permute.xlu0 0
    %111 = vperm.xlu0 %110, %v32
    %v112 = vpop.permute.xlu0 %111
    %v114 = vlaneseq
    %v115 = vshrl.u32 %v114, 7
    %v116 = vsub.s32 0, %v115
    %v117 = vrot.slane %v15, %v116
    %v118 = vmul.f32 %v37, %v117
    %v119 = vmul.f32 %v42, %v117
    %v120 = vmul.f32 %v47, %v117
    %v121 = vmul.f32 %v52, %v117
    %v122 = vmul.f32 %v57, %v117
    %v123 = vmul.f32 %v62, %v117
    %v124 = vmul.f32 %v67, %v117
    %v125 = vmul.f32 %v72, %v117
    %v126 = vmul.f32 %v77, %v117
    %v127 = vmul.f32 %v82, %v117
    %v128 = vmul.f32 %v87, %v117
    %v129 = vmul.f32 %v92, %v117
    %v130 = vmul.f32 %v97, %v117
    %v131 = vmul.f32 %v102, %v117
    %v132 = vmul.f32 %v107, %v117
    %v133 = vmul.f32 %v112, %v117
    %134 = vset.pattern.permute.xlu0 1
    %135 = vperm.xlu0 %134, %v17
    %v136 = vpop.permute.xlu0 %135
    %138 = vset.pattern.permute.xlu0 1
    %139 = vperm.xlu0 %138, %v18
    %v140 = vpop.permute.xlu0 %139
    %142 = vset.pattern.permute.xlu0 1
    %143 = vperm.xlu0 %142, %v19
    %v144 = vpop.permute.xlu0 %143
    %146 = vset.pattern.permute.xlu0 1
    %147 = vperm.xlu0 %146, %v20
    %v148 = vpop.permute.xlu0 %147
    %150 = vset.pattern.permute.xlu0 1
    %151 = vperm.xlu0 %150, %v21
    %v152 = vpop.permute.xlu0 %151
    %154 = vset.pattern.permute.xlu0 1
    %155 = vperm.xlu0 %154, %v22
    %v156 = vpop.permute.xlu0 %155
    %158 = vset.pattern.permute.xlu0 1
    %159 = vperm.xlu0 %158, %v23
    %v160 = vpop.permute.xlu0 %159
    %162 = vset.pattern.permute.xlu0 1
    %163 = vperm.xlu0 %162, %v24
    %v164 = vpop.permute.xlu0 %163
    %166 = vset.pattern.permute.xlu0 1
    %167 = vperm.xlu0 %166, %v25
    %v168 = vpop.permute.xlu0 %167
    %170 = vset.pattern.permute.xlu0 1
    %171 = vperm.xlu0 %170, %v26
    %v172 = vpop.permute.xlu0 %171
    %174 = vset.pattern.permute.xlu0 1
    %175 = vperm.xlu0 %174, %v27
    %v176 = vpop.permute.xlu0 %175
    %178 = vset.pattern.permute.xlu0 1
    %179 = vperm.xlu0 %178, %v28
    %v180 = vpop.permute.xlu0 %179
    %182 = vset.pattern.permute.xlu0 1
    %183 = vperm.xlu0 %182, %v29
    %v184 = vpop.permute.xlu0 %183
    %186 = vset.pattern.permute.xlu0 1
    %187 = vperm.xlu0 %186, %v30
    %v188 = vpop.permute.xlu0 %187
    %190 = vset.pattern.permute.xlu0 1
    %191 = vperm.xlu0 %190, %v31
    %v192 = vpop.permute.xlu0 %191
    %194 = vset.pattern.permute.xlu0 1
    %195 = vperm.xlu0 %194, %v32
    %v196 = vpop.permute.xlu0 %195
    %v198 = vlaneseq
    %v199 = vshrl.u32 %v198, 7
    %v200 = vsub.s32 0, %v199
    %v201 = vrot.slane %v16, %v200
    %v202 = vmul.f32 %v136, %v201
    %v203 = vmul.f32 %v140, %v201
    %v204 = vmul.f32 %v144, %v201
    %v205 = vmul.f32 %v148, %v201
    %v206 = vmul.f32 %v152, %v201
    %v207 = vmul.f32 %v156, %v201
    %v208 = vmul.f32 %v160, %v201
    %v209 = vmul.f32 %v164, %v201
    %v210 = vmul.f32 %v168, %v201
    %v211 = vmul.f32 %v172, %v201
    %v212 = vmul.f32 %v176, %v201
    %v213 = vmul.f32 %v180, %v201
    %v214 = vmul.f32 %v184, %v201
    %v215 = vmul.f32 %v188, %v201
    %v216 = vmul.f32 %v192, %v201
    %v217 = vmul.f32 %v196, %v201
    %v218 = vadd.f32 %v118, %v202
    %v219 = vadd.f32 %v119, %v203
    %v220 = vadd.f32 %v120, %v204
    %v221 = vadd.f32 %v121, %v205
    %v222 = vadd.f32 %v122, %v206
    %v223 = vadd.f32 %v123, %v207
    %v224 = vadd.f32 %v124, %v208
    %v225 = vadd.f32 %v125, %v209
    %v226 = vadd.f32 %v126, %v210
    %v227 = vadd.f32 %v127, %v211
    %v228 = vadd.f32 %v128, %v212
    %v229 = vadd.f32 %v129, %v213
    %v230 = vadd.f32 %v130, %v214
    %v231 = vadd.f32 %v131, %v215
    %v232 = vadd.f32 %v132, %v216
    %v233 = vadd.f32 %v133, %v217
    %234 = vset.pattern.permute.xlu0 2
    %235 = vperm.xlu0 %234, %v17
    %v236 = vpop.permute.xlu0 %235
    %238 = vset.pattern.permute.xlu0 2
    %239 = vperm.xlu0 %238, %v18
    %v240 = vpop.permute.xlu0 %239
    %242 = vset.pattern.permute.xlu0 2
    %243 = vperm.xlu0 %242, %v19
    %v244 = vpop.permute.xlu0 %243
    %246 = vset.pattern.permute.xlu0 2
    %247 = vperm.xlu0 %246, %v20
    %v248 = vpop.permute.xlu0 %247
    %250 = vset.pattern.permute.xlu0 2
    %251 = vperm.xlu0 %250, %v21
    %v252 = vpop.permute.xlu0 %251
    %254 = vset.pattern.permute.xlu0 2
    %255 = vperm.xlu0 %254, %v22
    %v256 = vpop.permute.xlu0 %255
    %258 = vset.pattern.permute.xlu0 2
    %259 = vperm.xlu0 %258, %v23
    %v260 = vpop.permute.xlu0 %259
    %262 = vset.pattern.permute.xlu0 2
    %263 = vperm.xlu0 %262, %v24
    %v264 = vpop.permute.xlu0 %263
    %266 = vset.pattern.permute.xlu0 2
    %267 = vperm.xlu0 %266, %v25
    %v268 = vpop.permute.xlu0 %267
    %270 = vset.pattern.permute.xlu0 2
    %271 = vperm.xlu0 %270, %v26
    %v272 = vpop.permute.xlu0 %271
    %274 = vset.pattern.permute.xlu0 2
    %275 = vperm.xlu0 %274, %v27
    %v276 = vpop.permute.xlu0 %275
    %278 = vset.pattern.permute.xlu0 2
    %279 = vperm.xlu0 %278, %v28
    %v280 = vpop.permute.xlu0 %279
    %282 = vset.pattern.permute.xlu0 2
    %283 = vperm.xlu0 %282, %v29
    %v284 = vpop.permute.xlu0 %283
    %286 = vset.pattern.permute.xlu0 2
    %287 = vperm.xlu0 %286, %v30
    %v288 = vpop.permute.xlu0 %287
    %290 = vset.pattern.permute.xlu0 2
    %291 = vperm.xlu0 %290, %v31
    %v292 = vpop.permute.xlu0 %291
    %294 = vset.pattern.permute.xlu0 2
    %295 = vperm.xlu0 %294, %v32
    %v296 = vpop.permute.xlu0 %295
    %v298 = vadd.f32 %v218, %v236
    %v299 = vadd.f32 %v219, %v240
    %v300 = vadd.f32 %v220, %v244
    %v301 = vadd.f32 %v221, %v248
    %v302 = vadd.f32 %v222, %v252
    %v303 = vadd.f32 %v223, %v256
    %v304 = vadd.f32 %v224, %v260
    %v305 = vadd.f32 %v225, %v264
    %v306 = vadd.f32 %v226, %v268
    %v307 = vadd.f32 %v227, %v272
    %v308 = vadd.f32 %v228, %v276
    %v309 = vadd.f32 %v229, %v280
    %v310 = vadd.f32 %v230, %v284
    %v311 = vadd.f32 %v231, %v288
    %v312 = vadd.f32 %v232, %v292
    %v313 = vadd.f32 %v233, %v296
    %v314 = vmax.f32 %v298, 0.0
    %v315 = vmax.f32 %v299, 0.0
    %v316 = vmax.f32 %v300, 0.0
    %v317 = vmax.f32 %v301, 0.0
    %v318 = vmax.f32 %v302, 0.0
    %v319 = vmax.f32 %v303, 0.0
    %v320 = vmax.f32 %v304, 0.0
    %v321 = vmax.f32 %v305, 0.0
    %v322 = vmax.f32 %v306, 0.0
    %v323 = vmax.f32 %v307, 0.0
    %v324 = vmax.f32 %v308, 0.0
    %v325 = vmax.f32 %v309, 0.0
    %v326 = vmax.f32 %v310, 0.0
    %v327 = vmax.f32 %v311, 0.0
    %v328 = vmax.f32 %v312, 0.0
    %v329 = vmax.f32 %v313, 0.0
    %v330 = vld [vmem:[%s1] sm:$0xff]
    %v331 = vld [vmem:[%s1 + $0x8] sm:$0xff]
    %v332 = vld [vmem:[%s1 + $0x10] sm:$0xff]
    %v333 = vld [vmem:[%s1 + $0x18] sm:$0xff]
    %v334 = vld [vmem:[%s1 + $0x20] sm:$0xff]
    %v335 = vld [vmem:[%s1 + $0x28] sm:$0xff]
    %v336 = vld [vmem:[%s1 + $0x30] sm:$0xff]
    %v337 = vld [vmem:[%s1 + $0x38] sm:$0xff]
    %v338 = vld [vmem:[%s1 + $0x40] sm:$0xff]
    %v339 = vld [vmem:[%s1 + $0x48] sm:$0xff]
    %v340 = vld [vmem:[%s1 + $0x50] sm:$0xff]
    %v341 = vld [vmem:[%s1 + $0x58] sm:$0xff]
    %v342 = vld [vmem:[%s1 + $0x60] sm:$0xff]
    %v343 = vld [vmem:[%s1 + $0x68] sm:$0xff]
    %v344 = vld [vmem:[%s1 + $0x70] sm:$0xff]
    %v345 = vld [vmem:[%s1 + $0x78] sm:$0xff]
    %346 = vset.pattern.permute.xlu0 3
    %347 = vperm.xlu0 %346, %v17
    %v348 = vpop.permute.xlu0 %347
    %350 = vset.pattern.permute.xlu0 3
    %351 = vperm.xlu0 %350, %v18
    %v352 = vpop.permute.xlu0 %351
    %354 = vset.pattern.permute.xlu0 3
    %355 = vperm.xlu0 %354, %v19
    %v356 = vpop.permute.xlu0 %355
    %358 = vset.pattern.permute.xlu0 3
    %359 = vperm.xlu0 %358, %v20
    %v360 = vpop.permute.xlu0 %359
    %362 = vset.pattern.permute.xlu0 3
    %363 = vperm.xlu0 %362, %v21
    %v364 = vpop.permute.xlu0 %363
    %366 = vset.pattern.permute.xlu0 3
    %367 = vperm.xlu0 %366, %v22
    %v368 = vpop.permute.xlu0 %367
    %370 = vset.pattern.permute.xlu0 3
    %371 = vperm.xlu0 %370, %v23
    %v372 = vpop.permute.xlu0 %371
    %374 = vset.pattern.permute.xlu0 3
    %375 = vperm.xlu0 %374, %v24
    %v376 = vpop.permute.xlu0 %375
    %378 = vset.pattern.permute.xlu0 3
    %379 = vperm.xlu0 %378, %v25
    %v380 = vpop.permute.xlu0 %379
    %382 = vset.pattern.permute.xlu0 3
    %383 = vperm.xlu0 %382, %v26
    %v384 = vpop.permute.xlu0 %383
    %386 = vset.pattern.permute.xlu0 3
    %387 = vperm.xlu0 %386, %v27
    %v388 = vpop.permute.xlu0 %387
    %390 = vset.pattern.permute.xlu0 3
    %391 = vperm.xlu0 %390, %v28
    %v392 = vpop.permute.xlu0 %391
    %394 = vset.pattern.permute.xlu0 3
    %395 = vperm.xlu0 %394, %v29
    %v396 = vpop.permute.xlu0 %395
    %398 = vset.pattern.permute.xlu0 3
    %399 = vperm.xlu0 %398, %v30
    %v400 = vpop.permute.xlu0 %399
    %402 = vset.pattern.permute.xlu0 3
    %403 = vperm.xlu0 %402, %v31
    %v404 = vpop.permute.xlu0 %403
    %406 = vset.pattern.permute.xlu0 3
    %407 = vperm.xlu0 %406, %v32
    %v408 = vpop.permute.xlu0 %407
    %410 = vmatprep.subr.mxu0 0.0
    %411 = vmatpush1.msra.mxu0 %v314
    %412 = vmatprep.subr.mxu0 0.0
    %413 = vmatpush1.msra.mxu0 %v315
    %414 = vmatprep.subr.mxu0 0.0
    %415 = vmatpush1.msra.mxu0 %v316
    %416 = vmatprep.subr.mxu0 0.0
    %417 = vmatpush1.msra.mxu0 %v317
    %418 = vmatprep.subr.mxu0 0.0
    %419 = vmatpush1.msra.mxu0 %v318
    %420 = vmatprep.subr.mxu0 0.0
    %421 = vmatpush1.msra.mxu0 %v319
    %422 = vmatprep.subr.mxu0 0.0
    %423 = vmatpush1.msra.mxu0 %v320
    %424 = vmatprep.subr.mxu0 0.0
    %425 = vmatpush1.msra.mxu0 %v321
    %426 = vmatprep.subr.mxu0 0.0
    %427 = vmatpush1.msra.mxu0 %v322
    %428 = vmatprep.subr.mxu0 0.0
    %429 = vmatpush1.msra.mxu0 %v323
    %430 = vmatprep.subr.mxu0 0.0
    %431 = vmatpush1.msra.mxu0 %v324
    %432 = vmatprep.subr.mxu0 0.0
    %433 = vmatpush1.msra.mxu0 %v325
    %434 = vmatprep.subr.mxu0 0.0
    %435 = vmatpush1.msra.mxu0 %v326
    %436 = vmatprep.subr.mxu0 0.0
    %437 = vmatpush1.msra.mxu0 %v327
    %438 = vmatprep.subr.mxu0 0.0
    %439 = vmatpush1.msra.mxu0 %v328
    %440 = vmatprep.subr.mxu0 0.0
    %441 = vmatpush1.msra.mxu0 %v329
    %442 = vmatprep.subr.mxu0 0.0
    %443 = vmatpush1.msra.mxu0 0.0
    %444 = vmatprep.subr.mxu0 0.0
    %445 = vmatpush1.msra.mxu0 0.0
    %446 = vmatprep.subr.mxu0 0.0
    %447 = vmatpush1.msra.mxu0 0.0
    %448 = vmatprep.subr.mxu0 0.0
    %449 = vmatpush1.msra.mxu0 0.0
    %450 = vmatprep.subr.mxu0 0.0
    %451 = vmatpush1.msra.mxu0 0.0
    %452 = vmatprep.subr.mxu0 0.0
    %453 = vmatpush1.msra.mxu0 0.0
    %454 = vmatprep.subr.mxu0 0.0
    %455 = vmatpush1.msra.mxu0 0.0
    %456 = vmatprep.subr.mxu0 0.0
    %457 = vmatpush1.msra.mxu0 0.0
    %458 = vmatprep.subr.mxu0 0.0
    %459 = vmatpush1.msra.mxu0 0.0
    %460 = vmatprep.subr.mxu0 0.0
    %461 = vmatpush1.msra.mxu0 0.0
    %462 = vmatprep.subr.mxu0 0.0
    %463 = vmatpush1.msra.mxu0 0.0
    %464 = vmatprep.subr.mxu0 0.0
    %465 = vmatpush1.msra.mxu0 0.0
    %466 = vmatprep.subr.mxu0 0.0
    %467 = vmatpush1.msra.mxu0 0.0
    %468 = vmatprep.subr.mxu0 0.0
    %469 = vmatpush1.msra.mxu0 0.0
    %470 = vmatprep.subr.mxu0 0.0
    %471 = vmatpush1.msra.mxu0 0.0
    %472 = vmatprep.subr.mxu0 0.0
    %473 = vmatpush1.msra.mxu0 0.0
    %474 = vmatprep.mubr.f32.mxu0 0.0
    %475 = vmatmul.mubr.f32.gmra.mrb[0].mxu0 %v330
    %v476 = vpop.f32.mrb[0].mxu0
    %v477 = vadd.f32 %v348, %v476
    %v478 = vpop.f32.mrb[0].mxu0
    %479 = vmatprep.mubr.f32.mxu0 0.0
    %480 = vmatmul.mubr.f32.gmra.mrb[0].mxu0 %v331
    %v481 = vpop.f32.mrb[0].mxu0
    %v482 = vadd.f32 %v352, %v481
    %v483 = vpop.f32.mrb[0].mxu0
    %484 = vmatprep.mubr.f32.mxu0 0.0
    %485 = vmatmul.mubr.f32.gmra.mrb[0].mxu0 %v332
    %v486 = vpop.f32.mrb[0].mxu0
    %v487 = vadd.f32 %v356, %v486
    %v488 = vpop.f32.mrb[0].mxu0
    %489 = vmatprep.mubr.f32.mxu0 0.0
    %490 = vmatmul.mubr.f32.gmra.mrb[0].mxu0 %v333
    %v491 = vpop.f32.mrb[0].mxu0
    %v492 = vadd.f32 %v360, %v491
    %v493 = vpop.f32.mrb[0].mxu0
    %494 = vmatprep.mubr.f32.mxu0 0.0
    %495 = vmatmul.mubr.f32.gmra.mrb[0].mxu0 %v334
    %v496 = vpop.f32.mrb[0].mxu0
    %v497 = vadd.f32 %v364, %v496
    %v498 = vpop.f32.mrb[0].mxu0
    %499 = vmatprep.mubr.f32.mxu0 0.0
    %500 = vmatmul.mubr.f32.gmra.mrb[0].mxu0 %v335
    %v501 = vpop.f32.mrb[0].mxu0
    %v502 = vadd.f32 %v368, %v501
    %v503 = vpop.f32.mrb[0].mxu0
    %504 = vmatprep.mubr.f32.mxu0 0.0
    %505 = vmatmul.mubr.f32.gmra.mrb[0].mxu0 %v336
    %v506 = vpop.f32.mrb[0].mxu0
    %v507 = vadd.f32 %v372, %v506
    %v508 = vpop.f32.mrb[0].mxu0
    %509 = vmatprep.mubr.f32.mxu0 0.0
    %510 = vmatmul.mubr.f32.gmra.mrb[0].mxu0 %v337
    %v511 = vpop.f32.mrb[0].mxu0
    %v512 = vadd.f32 %v376, %v511
    %v513 = vpop.f32.mrb[0].mxu0
    %514 = vmatprep.mubr.f32.mxu0 0.0
    %515 = vmatmul.mubr.f32.gmra.mrb[0].mxu0 %v338
    %v516 = vpop.f32.mrb[0].mxu0
    %v517 = vadd.f32 %v380, %v516
    %v518 = vpop.f32.mrb[0].mxu0
    %519 = vmatprep.mubr.f32.mxu0 0.0
    %520 = vmatmul.mubr.f32.gmra.mrb[0].mxu0 %v339
    %v521 = vpop.f32.mrb[0].mxu0
    %v522 = vadd.f32 %v384, %v521
    %v523 = vpop.f32.mrb[0].mxu0
    %524 = vmatprep.mubr.f32.mxu0 0.0
    %525 = vmatmul.mubr.f32.gmra.mrb[0].mxu0 %v340
    %v526 = vpop.f32.mrb[0].mxu0
    %v527 = vadd.f32 %v388, %v526
    %v528 = vpop.f32.mrb[0].mxu0
    %529 = vmatprep.mubr.f32.mxu0 0.0
    %530 = vmatmul.mubr.f32.gmra.mrb[0].mxu0 %v341
    %v531 = vpop.f32.mrb[0].mxu0
    %v532 = vadd.f32 %v392, %v531
    %v533 = vpop.f32.mrb[0].mxu0
    %534 = vmatprep.mubr.f32.mxu0 0.0
    %535 = vmatmul.mubr.f32.gmra.mrb[0].mxu0 %v342
    %v536 = vpop.f32.mrb[0].mxu0
    %v537 = vadd.f32 %v396, %v536
    %v538 = vpop.f32.mrb[0].mxu0
    %539 = vmatprep.mubr.f32.mxu0 0.0
    %540 = vmatmul.mubr.f32.gmra.mrb[0].mxu0 %v343
    %v541 = vpop.f32.mrb[0].mxu0
    %v542 = vadd.f32 %v400, %v541
    %v543 = vpop.f32.mrb[0].mxu0
    %544 = vmatprep.mubr.f32.mxu0 0.0
    %545 = vmatmul.mubr.f32.gmra.mrb[0].mxu0 %v344
    %v546 = vpop.f32.mrb[0].mxu0
    %v547 = vadd.f32 %v404, %v546
    %v548 = vpop.f32.mrb[0].mxu0
    %549 = vmatprep.mubr.f32.mxu0 0.0
    %550 = vmatmul.mubr.f32.gmra.mrb[0].mxu0 %v345
    %v551 = vpop.f32.mrb[0].mxu0
    %v552 = vadd.f32 %v408, %v551
    %v553 = vpop.f32.mrb[0].mxu0
    %554 = vdwg.mxu0
    %v555 = vmax.f32 %v477, 0.0
    %v556 = vmax.f32 %v482, 0.0
    %v557 = vmax.f32 %v487, 0.0
    %v558 = vmax.f32 %v492, 0.0
    %v559 = vmax.f32 %v497, 0.0
    %v560 = vmax.f32 %v502, 0.0
    %v561 = vmax.f32 %v507, 0.0
    %v562 = vmax.f32 %v512, 0.0
    %v563 = vmax.f32 %v517, 0.0
    %v564 = vmax.f32 %v522, 0.0
    %v565 = vmax.f32 %v527, 0.0
    %v566 = vmax.f32 %v532, 0.0
    %v567 = vmax.f32 %v537, 0.0
    %v568 = vmax.f32 %v542, 0.0
    %v569 = vmax.f32 %v547, 0.0
    %v570 = vmax.f32 %v552, 0.0
    %571 = vset.pattern.permute.xlu0 4
    %572 = vperm.xlu0 %571, %v17
    %v573 = vpop.permute.xlu0 %572
    %575 = vset.pattern.permute.xlu0 4
    %576 = vperm.xlu0 %575, %v18
    %v577 = vpop.permute.xlu0 %576
    %579 = vset.pattern.permute.xlu0 4
    %580 = vperm.xlu0 %579, %v19
    %v581 = vpop.permute.xlu0 %580
    %583 = vset.pattern.permute.xlu0 4
    %584 = vperm.xlu0 %583, %v20
    %v585 = vpop.permute.xlu0 %584
    %587 = vset.pattern.permute.xlu0 4
    %588 = vperm.xlu0 %587, %v21
    %v589 = vpop.permute.xlu0 %588
    %591 = vset.pattern.permute.xlu0 4
    %592 = vperm.xlu0 %591, %v22
    %v593 = vpop.permute.xlu0 %592
    %595 = vset.pattern.permute.xlu0 4
    %596 = vperm.xlu0 %595, %v23
    %v597 = vpop.permute.xlu0 %596
    %599 = vset.pattern.permute.xlu0 4
    %600 = vperm.xlu0 %599, %v24
    %v601 = vpop.permute.xlu0 %600
    %603 = vset.pattern.permute.xlu0 4
    %604 = vperm.xlu0 %603, %v25
    %v605 = vpop.permute.xlu0 %604
    %607 = vset.pattern.permute.xlu0 4
    %608 = vperm.xlu0 %607, %v26
    %v609 = vpop.permute.xlu0 %608
    %611 = vset.pattern.permute.xlu0 4
    %612 = vperm.xlu0 %611, %v27
    %v613 = vpop.permute.xlu0 %612
    %615 = vset.pattern.permute.xlu0 4
    %616 = vperm.xlu0 %615, %v28
    %v617 = vpop.permute.xlu0 %616
    %619 = vset.pattern.permute.xlu0 4
    %620 = vperm.xlu0 %619, %v29
    %v621 = vpop.permute.xlu0 %620
    %623 = vset.pattern.permute.xlu0 4
    %624 = vperm.xlu0 %623, %v30
    %v625 = vpop.permute.xlu0 %624
    %627 = vset.pattern.permute.xlu0 4
    %628 = vperm.xlu0 %627, %v31
    %v629 = vpop.permute.xlu0 %628
    %631 = vset.pattern.permute.xlu0 4
    %632 = vperm.xlu0 %631, %v32
    %v633 = vpop.permute.xlu0 %632
    %v635 = vmul.f32 %v555, %v573
    %v636 = vmul.f32 %v556, %v577
    %v637 = vmul.f32 %v557, %v581
    %v638 = vmul.f32 %v558, %v585
    %v639 = vmul.f32 %v559, %v589
    %v640 = vmul.f32 %v560, %v593
    %v641 = vmul.f32 %v561, %v597
    %v642 = vmul.f32 %v562, %v601
    %v643 = vmul.f32 %v563, %v605
    %v644 = vmul.f32 %v564, %v609
    %v645 = vmul.f32 %v565, %v613
    %v646 = vmul.f32 %v566, %v617
    %v647 = vmul.f32 %v567, %v621
    %v648 = vmul.f32 %v568, %v625
    %v649 = vmul.f32 %v569, %v629
    %v650 = vmul.f32 %v570, %v633
    %v651 = vadd.f32 %v635, %v636
    %v652 = vadd.f32 %v651, %v637
    %v653 = vadd.f32 %v652, %v638
    %v654 = vadd.f32 %v653, %v639
    %v655 = vadd.f32 %v654, %v640
    %v656 = vadd.f32 %v655, %v641
    %v657 = vadd.f32 %v656, %v642
    %v658 = vadd.f32 %v657, %v643
    %v659 = vadd.f32 %v658, %v644
    %v660 = vadd.f32 %v659, %v645
    %v661 = vadd.f32 %v660, %v646
    %v662 = vadd.f32 %v661, %v647
    %v663 = vadd.f32 %v662, %v648
    %v664 = vadd.f32 %v663, %v649
    %v665 = vadd.f32 %v664, %v650
    %v666 = vrot.slane %v665, 4
    %v667 = vadd.f32 %v665, %v666
    %v668 = vrot.slane %v667, 2
    %v669 = vadd.f32 %v667, %v668
    %v670 = vrot.slane %v669, 1
    %v671 = vadd.f32 %v669, %v670
    %673 = vset.pattern.permute.xlu0 5
    %674 = vperm.xlu0 %673, %v33
    %v675 = vpop.permute.xlu0 %674
    %v677 = vadd.f32 %v671, %v675
    %678 = vst [vmem:[#allocation2] sm:$0x1] %v677
    // Predicated region
    $region14: #{tpu_custom_call.1} parent=1 // pred_check
      _
    $region15: #{tpu_custom_call.1} parent=1 // pred_check_branch
      %680 = sbr.rel (0) target = $region17
    $region16: #{tpu_custom_call.1} parent=1 // pred_region
      %s682 = ssub.s32 16, 16
      %683 = vsyncadd [#allocation3], %s682
      %s685 = sshll.u32 [#allocation2], 4
      %s686 = int_to_ptr.vmem [resolvable:$true] %s685
      %688 = dma.vmem_to_hbm [thread:$0]  %s686, 16, %s3, [#allocation3]
    $region17: #{tpu_custom_call.1} parent=1 // pred_fallthru
      _
    // Predicated region
    $region18: #{tpu_custom_call.1} parent=1 // pred_check
      _
    $region19: #{tpu_custom_call.1} parent=1 // pred_check_branch
      %690 = sbr.rel (0) target = $region21
    $region20: #{tpu_custom_call.1} parent=1 // pred_region
      %691 = dma.done [#allocation3], 16
    $region21: #{tpu_custom_call.1} parent=1 // pred_fallthru
      _
    %692 = vsyncpa [#allocation3], 1

</llo_original>
